<compile_context>
chip_gen: v6e
topology: v6e:2x2x1
jax: 0.10.0
libtpu: 0.0.40
codegen_flags: <defaults>
</compile_context>

<pallas_src>
import jax
import jax.numpy as jnp
from jax.experimental import pallas as pl
from jax.experimental.pallas import tpu as pltpu

_LANE = 128
_SUBLANE = 8


def _round_up(x: int, m: int) -> int:
    return (x + m - 1) // m * m


def _hvac_reward_kernel(act_ref, temp_ref, params_ref, out_ref):
    """One (rooms_pad, TB) tile -> (1, TB) lane-dense rewards."""
    act = act_ref[...]            # (R, TB) f32, R = rooms padded to 8
    temp = temp_ref[...]          # (R, TB) f32
    p = params_ref[...]           # (R, 6)  f32 per-room constants
    w_air = p[:, 0:1]             # is_room * AIR_MAX * COST_AIR
    w_pen = p[:, 1:2]             # is_room * PENALTY
    w_abs = p[:, 2:3]             # is_room * 10
    t_low = p[:, 3:4]
    t_up = p[:, 4:5]
    t_mid = p[:, 5:6]
    viol = jnp.logical_or(temp < t_low, temp > t_up).astype(jnp.float32)
    per_room = w_air * act + w_pen * viol + w_abs * jnp.abs(t_mid - temp)
    out_ref[...] = -jnp.sum(per_room, axis=0, keepdims=True)     # (1, TB)


def hvac_reward(state, action, next_state, config, *, tile_b: int = 8192):
    """JAX wrapper matching HVACReward.forward semantics."""
    del state  # HVAC reward depends only on (action, next_state).

    n_rooms = action.shape[-1]
    batch_shape = action.shape[:-1]

    # ---- fold per-room constants (tiny, O(n_rooms) work in XLA) ----------
    ones = jnp.ones((n_rooms,), jnp.float32)
    air_max = jnp.asarray(config["AIR_MAX"], jnp.float32) * ones
    is_room = jnp.asarray(config["IS_ROOM"]).astype(jnp.float32) * ones
    cost_air = jnp.asarray(config["COST_AIR"], jnp.float32) * ones
    temp_low = jnp.asarray(config["TEMP_LOW"], jnp.float32) * ones
    temp_up = jnp.asarray(config["TEMP_UP"], jnp.float32) * ones
    penalty = jnp.asarray(config["PENALTY"], jnp.float32) * ones

    w_air = is_room * air_max * cost_air
    w_pen = is_room * penalty
    w_abs = is_room * 10.0
    t_mid = (temp_up + temp_low) * 0.5
    params = jnp.stack([w_air, w_pen, w_abs, temp_low, temp_up, t_mid], axis=1)

    # ---- feature-first, lane-dense layout ---------------------------------
    act2 = action.reshape(-1, n_rooms).astype(jnp.float32).T          # (R, B)
    temp2 = next_state[..., :-1].reshape(-1, n_rooms).astype(jnp.float32).T
    b = act2.shape[1]

    r_pad = _round_up(n_rooms, _SUBLANE)          # zero-weight rows -> exact 0
    tb = min(_round_up(tile_b, _LANE), _round_up(max(b, 1), _LANE))
    b_pad = _round_up(b, tb)
    act2 = jnp.pad(act2, ((0, r_pad - n_rooms), (0, b_pad - b)))
    temp2 = jnp.pad(temp2, ((0, r_pad - n_rooms), (0, b_pad - b)))
    params = jnp.pad(params, ((0, r_pad - n_rooms), (0, 0)))

    grid = (b_pad // tb,)
    cost = pl.CostEstimate(
        flops=6 * r_pad * b_pad,
        transcendentals=0,
        bytes_accessed=4 * (2 * r_pad * b_pad + b_pad + int(params.size)),
    )

    out = pl.pallas_call(
        _hvac_reward_kernel,
        out_shape=jax.ShapeDtypeStruct((1, b_pad), jnp.float32),
        grid=grid,
        in_specs=[
            pl.BlockSpec((r_pad, tb), lambda i: (0, i)),    # action tile
            pl.BlockSpec((r_pad, tb), lambda i: (0, i)),    # temp tile
            pl.BlockSpec((r_pad, 6), lambda i: (0, 0)),     # constants (resident)
        ],
        out_specs=pl.BlockSpec((1, tb), lambda i: (0, i)),
        compiler_params=pltpu.CompilerParams(
            dimension_semantics=("parallel",)),
        cost_estimate=cost,
    )(act2, temp2, params)

    return out[0, :b].reshape(batch_shape)


def _reference(state, action, next_state, config):
    """Pure-JAX reference mirroring the PyTorch forward."""
    del state
    air_max = jnp.asarray(config["AIR_MAX"], jnp.float32)
    is_room = jnp.asarray(config["IS_ROOM"]).astype(jnp.float32)
    cost_air = jnp.asarray(config["COST_AIR"], jnp.float32)
    temp_low = jnp.asarray(config["TEMP_LOW"], jnp.float32)
    temp_up = jnp.asarray(config["TEMP_UP"], jnp.float32)
    penalty = jnp.asarray(config["PENALTY"], jnp.float32)

    air = action.astype(jnp.float32) * air_max
    temp = next_state[..., :-1].astype(jnp.float32)
    oob = jnp.logical_or(temp < temp_low, temp > temp_up).astype(jnp.float32)
    reward = -(is_room * (air * cost_air
                          + oob * penalty
                          + 10.0 * jnp.abs((temp_up + temp_low) / 2.0 - temp))
               ).sum(axis=-1)
    return reward


if __name__ == "__main__":
    key = jax.random.PRNGKey(0)
    k_s, k_a, k_t = jax.random.split(key, 3)

    batch = (2, 8)
    n_rooms = 5
    # In-script stand-in for raylab.envs.environments.hvac.DEFAULT_CONFIG.
    config = dict(
        AIR_MAX=[10.0, 10.0, 10.0, 10.0, 10.0],
        IS_ROOM=[True, True, False, True, True],
        COST_AIR=1.0,
        TEMP_LOW=20.0,
        TEMP_UP=23.5,
        PENALTY=20000.0,
    )

    state = 21.0 + jax.random.normal(k_s, batch + (n_rooms + 1,), jnp.float32)
    action = jax.random.uniform(k_a, batch + (n_rooms,), jnp.float32)
    next_state = 21.5 + 3.0 * jax.random.normal(
        k_t, batch + (n_rooms + 1,), jnp.float32)

    out = hvac_reward(state, action, next_state, config)
    out = jax.block_until_ready(out)
    ref = _reference(state, action, next_state, config)

    ok = bool(jnp.allclose(out, ref, rtol=1e-5, atol=5e-2))
    ok &= out.shape == batch

    if ok:
        print("KERNEL_OK")
    else:
        print("KERNEL_MISMATCH")
</pallas_src>

<mosaic_0001>
module attributes {stable_mosaic.version = 11 : i64} {
  func.func @_hvac_reward_kernel(%arg0: i32, %arg1: memref<8x128xf32, #tpu.memory_space<vmem>>, %arg2: memref<8x128xf32, #tpu.memory_space<vmem>>, %arg3: memref<8x6xf32, #tpu.memory_space<vmem>>, %arg4: memref<1x128xf32, #tpu.memory_space<vmem>>) attributes {dimension_semantics = [#tpu.dimension_semantics<parallel>], iteration_bounds = array<i64: 1>, scalar_prefetch = 0 : i64, scratch_operands = 0 : i64, tpu.core_type = #tpu.core_type<tc>, window_params = [{transform_indices = @transform_0, window_bounds = array<i64: 8, 128>}, {transform_indices = @transform_1, window_bounds = array<i64: 8, 128>}, {pipeline_mode = #tpu.pipeline_mode<synchronous>, transform_indices = @transform_2, window_bounds = array<i64: 8, 6>}, {transform_indices = @transform_3, window_bounds = array<i64: 1, 128>}]} {
    %c0 = arith.constant 0 : index
    %c0_0 = arith.constant 0 : index
    %0 = vector.load %arg1[%c0, %c0_0] : memref<8x128xf32, #tpu.memory_space<vmem>>, vector<8x128xf32>
    %c0_1 = arith.constant 0 : index
    %c0_2 = arith.constant 0 : index
    %1 = vector.load %arg2[%c0_1, %c0_2] : memref<8x128xf32, #tpu.memory_space<vmem>>, vector<8x128xf32>
    %c0_3 = arith.constant 0 : index
    %c0_4 = arith.constant 0 : index
    %2 = vector.load %arg3[%c0_3, %c0_4] : memref<8x6xf32, #tpu.memory_space<vmem>>, vector<8x6xf32>
    %3 = vector.extract_strided_slice %2 {offsets = [0, 0], sizes = [8, 1], strides = [1, 1]} : vector<8x6xf32> to vector<8x1xf32>
    %4 = vector.extract_strided_slice %2 {offsets = [0, 1], sizes = [8, 1], strides = [1, 1]} : vector<8x6xf32> to vector<8x1xf32>
    %5 = vector.extract_strided_slice %2 {offsets = [0, 2], sizes = [8, 1], strides = [1, 1]} : vector<8x6xf32> to vector<8x1xf32>
    %6 = vector.extract_strided_slice %2 {offsets = [0, 3], sizes = [8, 1], strides = [1, 1]} : vector<8x6xf32> to vector<8x1xf32>
    %7 = vector.extract_strided_slice %2 {offsets = [0, 4], sizes = [8, 1], strides = [1, 1]} : vector<8x6xf32> to vector<8x1xf32>
    %8 = vector.extract_strided_slice %2 {offsets = [0, 5], sizes = [8, 1], strides = [1, 1]} : vector<8x6xf32> to vector<8x1xf32>
    %9 = vector.broadcast %6 : vector<8x1xf32> to vector<8x128xf32>
    %10 = arith.cmpf olt, %1, %9 : vector<8x128xf32>
    %11 = vector.broadcast %7 : vector<8x1xf32> to vector<8x128xf32>
    %12 = arith.cmpf ogt, %1, %11 : vector<8x128xf32>
    %13 = arith.ori %10, %12 : vector<8x128xi1>
    %14 = arith.extui %13 : vector<8x128xi1> to vector<8x128xi32>
    %15 = arith.sitofp %14 : vector<8x128xi32> to vector<8x128xf32>
    %16 = vector.broadcast %3 : vector<8x1xf32> to vector<8x128xf32>
    %17 = arith.mulf %16, %0 : vector<8x128xf32>
    %18 = vector.broadcast %4 : vector<8x1xf32> to vector<8x128xf32>
    %19 = arith.mulf %18, %15 : vector<8x128xf32>
    %20 = arith.addf %17, %19 : vector<8x128xf32>
    %21 = vector.broadcast %8 : vector<8x1xf32> to vector<8x128xf32>
    %22 = arith.subf %21, %1 : vector<8x128xf32>
    %23 = math.absf %22 : vector<8x128xf32>
    %24 = vector.broadcast %5 : vector<8x1xf32> to vector<8x128xf32>
    %25 = arith.mulf %24, %23 : vector<8x128xf32>
    %26 = arith.addf %20, %25 : vector<8x128xf32>
    %cst = arith.constant dense<0.000000e+00> : vector<128xf32>
    %27 = vector.multi_reduction <add>, %26, %cst [0] : vector<8x128xf32> to vector<128xf32>
    %28 = vector.shape_cast %27 : vector<128xf32> to vector<1x128xf32>
    %cst_5 = arith.constant 0.000000e+00 : f32
    %29 = vector.broadcast %cst_5 : f32 to vector<1x128xf32>
    %30 = arith.subf %29, %28 : vector<1x128xf32>
    %c0_6 = arith.constant 0 : index
    %c0_7 = arith.constant 0 : index
    %31 = vector.load %arg4[%c0_6, %c0_7] : memref<1x128xf32, #tpu.memory_space<vmem>>, vector<1x128xf32>
    tpu.vector_store %arg4[%c0_6, %c0_7], %30 {strides = array<i32>} : memref<1x128xf32, #tpu.memory_space<vmem>>, vector<1x128xf32>,
    return
  }
  func.func @transform_0(%arg0: i32) -> (i32, i32) {
    %c0_i32 = arith.constant 0 : i32
    %c0_i32_0 = arith.constant 0 : i32
    return %c0_i32, %arg0 : i32, i32
  }
  func.func @transform_1(%arg0: i32) -> (i32, i32) {
    %c0_i32 = arith.constant 0 : i32
    %c0_i32_0 = arith.constant 0 : i32
    return %c0_i32, %arg0 : i32, i32
  }
  func.func @transform_2(%arg0: i32) -> (i32, i32) {
    %c0_i32 = arith.constant 0 : i32
    %c0_i32_0 = arith.constant 0 : i32
    %c0_i32_1 = arith.constant 0 : i32
    return %c0_i32, %c0_i32_0 : i32, i32
  }
  func.func @transform_3(%arg0: i32) -> (i32, i32) {
    %c0_i32 = arith.constant 0 : i32
    %c0_i32_0 = arith.constant 0 : i32
    return %c0_i32, %arg0 : i32, i32
  }
}

</mosaic_0001>

<llo_original>
// kernel: tpu_custom_call.1
$region0: #{tpu_custom_call.1}
  #allocation0 [shape = 'u32[]', space=smem, size = 0x4, offset = 0x4, fixed_abs, tag = 'smem constant byte address 0x4 - core index']
  #allocation1 [shape = 'u32[144,128]{1,0:T(1,128)}', space=vmem, size = 0x12000, scoped, tag = 'internal scratch']
  %s0 = inlined_call_operand.hbm [shape: f32[8,128], index: 0, kind: input, shape index: {}]
  %s1 = inlined_call_operand.hbm [shape: f32[8,128], index: 1, kind: input, shape index: {}]
  %s2 = inlined_call_operand.hbm [shape: f32[8,6], index: 2, kind: input, shape index: {}]
  %s3 = inlined_call_operand.hbm [shape: f32[1,128], index: 3, kind: output, shape index: {}]
  %s4 = sld [smem:[#allocation0]]
  $region34: #{tpu_custom_call.1} parent=0
    _
  %s6 = ssub.s32 1, %s4
  %s7 = scalar_select 0, %s6, %s4
  $region1: #{tpu_custom_call.1} parent=0
    #allocation2 [shape = 'u8[4096]{0}', space=vmem, size = 0x1000, scoped, tag = 'input window, operand 0, single buffered']
    #allocation3 [shape = 's32[1]{0}', space=sflag, size = 0x4, scoped, tag = 'scoped memory for tpu_custom_call.1']
    #allocation4 [shape = 's32[1]{0}', space=sflag, size = 0x4, scoped, tag = 'scoped memory for tpu_custom_call.1']
    #allocation5 [shape = 'u8[4096]{0}', space=vmem, size = 0x1000, scoped, tag = 'input window, operand 1, single buffered']
    #allocation6 [shape = 's32[1]{0}', space=sflag, size = 0x4, scoped, tag = 'scoped memory for tpu_custom_call.1']
    #allocation7 [shape = 'u8[4096]{0}', space=vmem, size = 0x1000, scoped, tag = 'input window, operand 2, single buffered']
    #allocation8 [shape = 'u8[512]{0}', space=vmem, size = 0x400, scoped, tag = 'output window, operand 0, single buffered']
    %8 = vsyncpa [#allocation3], 0
    %9 = vsyncpa [#allocation6], 0
    %10 = vsyncpa [#allocation4], 0
    // Predicated region
    $region2: #{tpu_custom_call.1} parent=1 // pred_check
      _
    $region3: #{tpu_custom_call.1} parent=1 // pred_check_branch
      %12 = sbr.rel (0) target = $region5
    $region4: #{tpu_custom_call.1} parent=1 // pred_region
      %s14 = ssub.s32 128, 128
      %15 = vsyncadd [#allocation3], %s14
      %s17 = sshll.u32 [#allocation2], 4
      %s18 = int_to_ptr.vmem [resolvable:$true] %s17
      %20 = dma.hbm_to_vmem [thread:$0]  %s0, 128, %s18, [#allocation3]
    $region5: #{tpu_custom_call.1} parent=1 // pred_fallthru
      _
    // Predicated region
    $region6: #{tpu_custom_call.1} parent=1 // pred_check
      _
    $region7: #{tpu_custom_call.1} parent=1 // pred_check_branch
      %22 = sbr.rel (0) target = $region9
    $region8: #{tpu_custom_call.1} parent=1 // pred_region
      %s24 = ssub.s32 128, 128
      %25 = vsyncadd [#allocation6], %s24
      %s27 = sshll.u32 [#allocation5], 4
      %s28 = int_to_ptr.vmem [resolvable:$true] %s27
      %30 = dma.hbm_to_vmem [thread:$0]  %s1, 128, %s28, [#allocation6]
    $region9: #{tpu_custom_call.1} parent=1 // pred_fallthru
      _
    // Predicated region
    $region10: #{tpu_custom_call.1} parent=1 // pred_check
      _
    $region11: #{tpu_custom_call.1} parent=1 // pred_check_branch
      %32 = sbr.rel (0) target = $region13
    $region12: #{tpu_custom_call.1} parent=1 // pred_region
      %s34 = ssub.s32 128, 128
      %35 = vsyncadd [#allocation6], %s34
      %s37 = sshll.u32 [#allocation7], 4
      %s38 = int_to_ptr.vmem [resolvable:$true] %s37
      %40 = dma.hbm_to_vmem [thread:$0]  %s2, 128, %s38, [#allocation6]
    $region13: #{tpu_custom_call.1} parent=1 // pred_fallthru
      _
    // Predicated region
    $region14: #{tpu_custom_call.1} parent=1 // pred_check
      _
    $region15: #{tpu_custom_call.1} parent=1 // pred_check_branch
      %42 = sbr.rel (0) target = $region17
    $region16: #{tpu_custom_call.1} parent=1 // pred_region
      %43 = dma.done [#allocation3], 128
    $region17: #{tpu_custom_call.1} parent=1 // pred_fallthru
      _
    // Predicated region
    $region18: #{tpu_custom_call.1} parent=1 // pred_check
      _
    $region19: #{tpu_custom_call.1} parent=1 // pred_check_branch
      %45 = sbr.rel (0) target = $region21
    $region20: #{tpu_custom_call.1} parent=1 // pred_region
      %46 = dma.done [#allocation6], 128
    $region21: #{tpu_custom_call.1} parent=1 // pred_fallthru
      _
    // Predicated region
    $region22: #{tpu_custom_call.1} parent=1 // pred_check
      _
    $region23: #{tpu_custom_call.1} parent=1 // pred_check_branch
      %48 = sbr.rel (0) target = $region25
    $region24: #{tpu_custom_call.1} parent=1 // pred_region
      %49 = dma.done [#allocation6], 128
    $region25: #{tpu_custom_call.1} parent=1 // pred_fallthru
      _
    %v50 = vld [vmem:[#allocation2] sm:$0xff]
    %v51 = vld [vmem:[#allocation5] sm:$0xff]
    %v52 = vld [vmem:[#allocation7] sm:$0xff]
    %54 = vset.pattern.permute.xlu0 3
    %55 = vperm.xlu0 %54, %v52
    %v56 = vpop.permute.xlu0 %55
    %vm58 = vcmp.lt.f32.partialorder %v51, %v56
    %59 = vset.pattern.permute.xlu0 4
    %60 = vperm.xlu0 %59, %v52
    %v61 = vpop.permute.xlu0 %60
    %vm63 = vcmp.gt.f32.partialorder %v51, %v61
    %vm64 = vmor %vm58, %vm63
    %v65 = vsel %vm64, 1, 0
    %v66 = vcvt.s32.f32 %v65
    %67 = vset.pattern.permute.xlu0 0
    %68 = vperm.xlu0 %67, %v52
    %v69 = vpop.permute.xlu0 %68
    %v71 = vmul.f32 %v69, %v50
    %72 = vset.pattern.permute.xlu0 1
    %73 = vperm.xlu0 %72, %v52
    %v74 = vpop.permute.xlu0 %73
    %v76 = vmul.f32 %v74, %v66
    %v77 = vadd.f32 %v71, %v76
    %78 = vset.pattern.permute.xlu0 5
    %79 = vperm.xlu0 %78, %v52
    %v80 = vpop.permute.xlu0 %79
    %v82 = vsub.f32 %v80, %v51
    %v83 = vand.u32 2147483647, %v82
    %84 = vset.pattern.permute.xlu0 2
    %85 = vperm.xlu0 %84, %v52
    %v86 = vpop.permute.xlu0 %85
    %v88 = vmul.f32 %v86, %v83
    %v89 = vadd.f32 %v77, %v88
    %v90 = vrot.slane %v89, 4
    %v91 = vadd.f32 %v89, %v90
    %v92 = vrot.slane %v91, 2
    %v93 = vadd.f32 %v91, %v92
    %v94 = vrot.slane %v93, 1
    %v95 = vadd.f32 %v93, %v94
    %v96 = vsub.f32 0.0, %v95
    %97 = vst [vmem:[#allocation8] sm:$0x1] %v96
    // Predicated region
    $region26: #{tpu_custom_call.1} parent=1 // pred_check
      _
    $region27: #{tpu_custom_call.1} parent=1 // pred_check_branch
      %99 = sbr.rel (0) target = $region29
    $region28: #{tpu_custom_call.1} parent=1 // pred_region
      %s101 = ssub.s32 16, 16
      %102 = vsyncadd [#allocation4], %s101
      %s104 = sshll.u32 [#allocation8], 4
      %s105 = int_to_ptr.vmem [resolvable:$true] %s104
      %107 = dma.vmem_to_hbm [thread:$0]  %s105, 16, %s3, [#allocation4]
    $region29: #{tpu_custom_call.1} parent=1 // pred_fallthru
      _
    // Predicated region
    $region30: #{tpu_custom_call.1} parent=1 // pred_check
      _
    $region31: #{tpu_custom_call.1} parent=1 // pred_check_branch
      %109 = sbr.rel (0) target = $region33
    $region32: #{tpu_custom_call.1} parent=1 // pred_region
      %110 = dma.done [#allocation4], 16
    $region33: #{tpu_custom_call.1} parent=1 // pred_fallthru
      _
    %111 = vsyncpa [#allocation3], 1
    %112 = vsyncpa [#allocation6], 1
    %113 = vsyncpa [#allocation4], 1

</llo_original>
